<compile_context>
chip_gen: v7x
topology: tpu7x:2x2x1
jax: 0.10.0
libtpu: 0.0.40
codegen_flags: <defaults>
</compile_context>

<pallas_src>
import functools

import jax
import jax.numpy as jnp
from jax import lax
from jax.experimental import pallas as pl
from jax.experimental.pallas import tpu as pltpu

N_SPK = 16               # hard-coded by the module: dvec.reshape(16, 8, -1)
N_UTT = 8
R = N_SPK * N_UTT        # 128 utterance rows
EPS = 1e-6               # eps of F.cosine_similarity


# ---------------------------------------------------------------------------
# shared in-kernel math (transposed, lane-dense layout)
# ---------------------------------------------------------------------------
def _loss_from_group(x, mask):
    """Scalar GE2E contrast loss from one [R, D] utterance tile.

    mask : [N_SPK, R] f32, 1.0 where the column (utterance) belongs to that
           row's speaker.  It is used both as the centroid-averaging matrix
           (cent = mask @ x / N_UTT, on the MXU) and as the positive mask.
    """
    x = x.astype(jnp.float32)

    # Speaker centroids via MXU mask-matmul; the 1/8 is folded as a scalar.
    cent = jnp.dot(mask, x, preferred_element_type=jnp.float32) * (1.0 / N_UTT)  # [16, D]

    # Utterance-vs-centroid dot products with utterances on the lane axis.
    dots = lax.dot_general(
        cent, x, dimension_numbers=(((1,), (1,)), ((), ())),
        preferred_element_type=jnp.float32)                                      # [16, R]

    # Cosine normalization: rsqrt on the squared-norm product (EUP), with the
    # EPS^2 clamp (== max(||x||*||c||, EPS) of F.cosine_similarity).
    x_sq = jnp.sum(x * x, axis=-1)                          # [R]
    c_sq = jnp.sum(cent * cent, axis=-1, keepdims=True)     # [16, 1]
    inv = lax.rsqrt(jnp.maximum(c_sq * x_sq[None, :], EPS * EPS))                # [16, R]
    sims = dots * inv                                                            # [16, R]

    # Positive = own-speaker row; negatives = the other 15 rows.  |sims| <= 1
    # (Cauchy-Schwarz + clamp), so a -4 bias on the positive row keeps it
    # below every negative row without -inf sentinels.
    pos = jnp.sum(sims * mask, axis=0)                      # [R]
    neg_max = jnp.max(sims - 4.0 * mask, axis=0)            # [R]

    # 1 - sigmoid(p) + sigmoid(n)  ==  sigmoid(-p) + sigmoid(n)
    loss_per_utt = jax.nn.sigmoid(-pos) + jax.nn.sigmoid(neg_max)                # [R]
    return jnp.sum(loss_per_utt) * (1.0 / R)


def ge2e_kernel(x_ref, mask_ref, o_ref):
    # x_ref: [R, D] VMEM; mask_ref: [N_SPK, R] VMEM; o_ref: [1] SMEM scalar.
    o_ref[0] = _loss_from_group(x_ref[...], mask_ref[...])


def ge2e_kernel_batched(x_ref, mask_ref, o_ref, *, G):
    # x_ref: [G, R, D] VMEM block (G groups per grid step);
    # o_ref: [1, 1, G] VMEM block (aggregated, lane-oriented per-step output).
    mask = mask_ref[...]

    # Statically unrolled loop over the G sub-tiles (fixed small trip count);
    # each group is two tiny MXU matmuls + a lane-dense VPU/XLU/EUP tail.
    losses = [_loss_from_group(x_ref[g], mask) for g in range(G)]

    # Scatter the G scalars into one (1, 1, G) store (no per-group blocks).
    lane = lax.broadcasted_iota(jnp.int32, (1, 1, G), 2)
    out = jnp.zeros((1, 1, G), jnp.float32)
    for g in range(G):
        out = jnp.where(lane == g, losses[g], out)
    o_ref[...] = out


# ---------------------------------------------------------------------------
# host-side constant tile (computed once, passed as a kernel input)
# ---------------------------------------------------------------------------
@functools.lru_cache(maxsize=1)
def _const_mask():
    spk_of_row = jnp.arange(R, dtype=jnp.int32) // N_UTT          # [R]
    spk_ids = jnp.arange(N_SPK, dtype=jnp.int32)                  # [N_SPK]
    return (spk_ids[:, None] == spk_of_row[None, :]).astype(jnp.float32)  # [16, 128]


def _pick_group_block(B, D):
    """Groups per grid step: amortize ~0.35us/step overhead while keeping the
    double-buffered input block small enough for v5e's 16 MiB default scoped
    VMEM (and v7x's 64 MiB physical), and keeping >= 2 grid steps for v7x's
    two TensorCores."""
    bytes_per_group = R * D * 4
    g_cap = max(1, (2 * 1024 * 1024) // bytes_per_group)   # block <= ~2 MiB
    g_cap = min(g_cap, 32, B)
    if B > 1:
        g_cap = min(g_cap, max(1, B // 2))                  # >= 2 grid steps
    g = 1
    for cand in range(1, g_cap + 1):                        # largest divisor of B
        if B % cand == 0:
            g = cand
    return g


# ---------------------------------------------------------------------------
# wrappers
# ---------------------------------------------------------------------------
def ge2e_loss(dvec, loss_w=None, loss_b=None):
    """Forward pass of GE2ELoss for one group (matches the torch module)."""
    del loss_w, loss_b  # the module's _contrast_loss never uses them
    total = 1
    for s in dvec.shape:
        total *= s
    D = total // R
    x = jnp.asarray(dvec, jnp.float32).reshape(R, D)
    mask = _const_mask()

    out = pl.pallas_call(
        ge2e_kernel,
        out_shape=jax.ShapeDtypeStruct((1,), jnp.float32),
        in_specs=[
            pl.BlockSpec(memory_space=pltpu.MemorySpace.VMEM),
            pl.BlockSpec(memory_space=pltpu.MemorySpace.VMEM),
        ],
        out_specs=pl.BlockSpec(memory_space=pltpu.MemorySpace.SMEM),
    )(x, mask)
    return out[0]


def ge2e_loss_batched(dvec_batched, loss_w=None, loss_b=None):
    """One pallas_call over B independent GE2E groups ([B, 16*8, D]).

    G groups are processed per grid step (amortizes step overhead / tiny
    DMAs); the "parallel" batch axis shards steps across the two TensorCores
    on v7x.
    """
    del loss_w, loss_b
    B = dvec_batched.shape[0]
    total = 1
    for s in dvec_batched.shape[1:]:
        total *= s
    D = total // R
    x = jnp.asarray(dvec_batched, jnp.float32).reshape(B, R, D)
    mask = _const_mask()

    G = _pick_group_block(B, D)
    steps = B // G

    out = pl.pallas_call(
        functools.partial(ge2e_kernel_batched, G=G),
        out_shape=jax.ShapeDtypeStruct((steps, 1, G), jnp.float32),
        grid=(steps,),
        in_specs=[
            pl.BlockSpec((G, R, D), lambda b: (b, 0, 0)),
            pl.BlockSpec((N_SPK, R), lambda b: (0, 0)),
        ],
        out_specs=pl.BlockSpec((1, 1, G), lambda b: (b, 0, 0)),
        compiler_params=pltpu.CompilerParams(
            dimension_semantics=("parallel",)),
    )(x, mask)
    return out.reshape(B)


# ---------------------------------------------------------------------------
# pure-JAX reference mirroring the PyTorch forward, for validation
# ---------------------------------------------------------------------------
def _ref_loss(dvec):
    dv = jnp.asarray(dvec, jnp.float32).reshape(N_SPK, N_UTT, -1)
    cent = dv.mean(axis=1)                                    # [N, D]
    num = jnp.einsum("smd,nd->smn", dv, cent)
    den = jnp.maximum(
        jnp.linalg.norm(dv, axis=-1)[:, :, None]
        * jnp.linalg.norm(cent, axis=-1)[None, None, :],
        EPS,
    )
    sims = num / den                                          # [N, M, N]
    eye = jnp.eye(N_SPK, dtype=bool)[:, None, :]
    pos = jnp.sum(jnp.where(eye, sims, 0.0), axis=-1)         # [N, M]
    neg = jnp.max(jnp.where(eye, -jnp.inf, sims), axis=-1)    # [N, M]
    return jnp.mean(1.0 - jax.nn.sigmoid(pos) + jax.nn.sigmoid(neg))


if __name__ == "__main__":
    # Parameter parity with the module's __init__ (unused in the forward).
    loss_w = jnp.array([10.0], jnp.float32)
    loss_b = jnp.array([-5.0], jnp.float32)

    D = 32
    key = jax.random.PRNGKey(0)
    k1, k2 = jax.random.split(key)

    # --- single-group forward (exactly the module: dvec.reshape(16, 8, -1)) ---
    x = jax.random.normal(k1, (R, D), dtype=jnp.float32)
    loss = ge2e_loss(x, loss_w, loss_b)
    jax.block_until_ready(loss)
    ref = _ref_loss(x)
    assert jnp.allclose(loss, ref, rtol=1e-5, atol=1e-5), (loss, ref)

    # --- batched variant: one call for several groups (G=8 per grid step) ---
    B = 16
    xb = jax.random.normal(k2, (B, R, D), dtype=jnp.float32)
    losses = ge2e_loss_batched(xb, loss_w, loss_b)
    jax.block_until_ready(losses)
    for b in range(B):
        refb = _ref_loss(xb[b])
        assert jnp.allclose(losses[b], refb, rtol=1e-5, atol=1e-5), (b, losses[b], refb)

    print("KERNEL_OK")
</pallas_src>

<mosaic_0001>
module attributes {stable_mosaic.version = 11 : i64} {
  func.func @ge2e_kernel(%arg0: memref<128x32xf32, #tpu.memory_space<vmem>>, %arg1: memref<16x128xf32, #tpu.memory_space<vmem>>, %arg2: memref<1xf32, #tpu.memory_space<smem>>) attributes {dimension_semantics = [], scalar_prefetch = 0 : i64, scratch_operands = 0 : i64, tpu.core_type = #tpu.core_type<tc>} {
    %c0 = arith.constant 0 : index
    %c0_0 = arith.constant 0 : index
    %0 = vector.load %arg0[%c0, %c0_0] : memref<128x32xf32, #tpu.memory_space<vmem>>, vector<128x32xf32>
    %c0_1 = arith.constant 0 : index
    %c0_2 = arith.constant 0 : index
    %1 = vector.load %arg1[%c0_1, %c0_2] : memref<16x128xf32, #tpu.memory_space<vmem>>, vector<16x128xf32>
    %cst = arith.constant dense<0.000000e+00> : vector<16x32xf32>
    %2 = tpu.matmul %1, %0, %cst {dimension_numbers = #tpu.dot_dimension_numbers<[1], [0], [0], [1], [0, 0, 1, 1], [], []>} : vector<16x128xf32>, vector<128x32xf32>, vector<16x32xf32> -> vector<16x32xf32>
    %cst_3 = arith.constant 1.250000e-01 : f32
    %3 = vector.broadcast %cst_3 : f32 to vector<16x32xf32>
    %4 = arith.mulf %2, %3 : vector<16x32xf32>
    %cst_4 = arith.constant dense<0.000000e+00> : vector<16x128xf32>
    %5 = tpu.matmul %4, %0, %cst_4 {dimension_numbers = #tpu.dot_dimension_numbers<[1], [1], [0], [0], [0, 0, 1, 0], [], []>} : vector<16x32xf32>, vector<128x32xf32>, vector<16x128xf32> -> vector<16x128xf32>
    %6 = arith.mulf %0, %0 : vector<128x32xf32>
    %cst_5 = arith.constant dense<0.000000e+00> : vector<128xf32>
    %7 = vector.multi_reduction <add>, %6, %cst_5 [1] : vector<128x32xf32> to vector<128xf32>
    %8 = arith.mulf %4, %4 : vector<16x32xf32>
    %cst_6 = arith.constant dense<0.000000e+00> : vector<16xf32>
    %9 = vector.multi_reduction <add>, %8, %cst_6 [1] : vector<16x32xf32> to vector<16xf32>
    %10 = vector.shape_cast %9 : vector<16xf32> to vector<16x1xf32>
    %11 = vector.shape_cast %7 : vector<128xf32> to vector<1x128xf32>
    %12 = vector.broadcast %10 : vector<16x1xf32> to vector<16x128xf32>
    %13 = vector.broadcast %11 : vector<1x128xf32> to vector<16x128xf32>
    %14 = arith.mulf %12, %13 : vector<16x128xf32>
    %cst_7 = arith.constant 9.99999996E-13 : f32
    %15 = vector.broadcast %cst_7 : f32 to vector<16x128xf32>
    %16 = arith.maximumf %14, %15 : vector<16x128xf32>
    %17 = math.rsqrt %16 : vector<16x128xf32>
    %18 = arith.mulf %5, %17 : vector<16x128xf32>
    %19 = arith.mulf %18, %1 : vector<16x128xf32>
    %cst_8 = arith.constant dense<0.000000e+00> : vector<128xf32>
    %20 = vector.multi_reduction <add>, %19, %cst_8 [0] : vector<16x128xf32> to vector<128xf32>
    %cst_9 = arith.constant 4.000000e+00 : f32
    %21 = vector.broadcast %cst_9 : f32 to vector<16x128xf32>
    %22 = arith.mulf %21, %1 : vector<16x128xf32>
    %23 = arith.subf %18, %22 : vector<16x128xf32>
    %cst_10 = arith.constant dense<0xFF800000> : vector<128xf32>
    %24 = vector.multi_reduction <maximumf>, %23, %cst_10 [0] : vector<16x128xf32> to vector<128xf32>
    %cst_11 = arith.constant 0.000000e+00 : f32
    %25 = vector.broadcast %cst_11 : f32 to vector<128xf32>
    %26 = arith.subf %25, %20 : vector<128xf32>
    %27 = arith.negf %26 : vector<128xf32>
    %28 = math.exp %27 : vector<128xf32>
    %cst_12 = arith.constant 1.000000e+00 : f32
    %29 = vector.broadcast %cst_12 : f32 to vector<128xf32>
    %30 = arith.addf %29, %28 : vector<128xf32>
    %31 = arith.divf %29, %30 : vector<128xf32>
    %32 = arith.negf %24 : vector<128xf32>
    %33 = math.exp %32 : vector<128xf32>
    %cst_13 = arith.constant 1.000000e+00 : f32
    %34 = vector.broadcast %cst_13 : f32 to vector<128xf32>
    %35 = arith.addf %34, %33 : vector<128xf32>
    %36 = arith.divf %34, %35 : vector<128xf32>
    %37 = arith.addf %31, %36 : vector<128xf32>
    %38 = vector.shape_cast %37 : vector<128xf32> to vector<1x128xf32>
    %cst_14 = arith.constant dense<0.000000e+00> : vector<1xf32>
    %39 = vector.multi_reduction <add>, %38, %cst_14 [1] : vector<1x128xf32> to vector<1xf32>
    %40 = vector.shape_cast %39 : vector<1xf32> to vector<1x1xf32>
    %41 = vector.extract %40[0, 0] : f32 from vector<1x1xf32>
    %cst_15 = arith.constant 7.812500e-03 : f32
    %42 = arith.mulf %41, %cst_15 : f32
    %c0_16 = arith.constant 0 : index
    %43 = memref.load %arg2[%c0_16] : memref<1xf32, #tpu.memory_space<smem>>
    memref.store %42, %arg2[%c0_16] : memref<1xf32, #tpu.memory_space<smem>>
    return
  }
}

</mosaic_0001>

<llo_original>
// kernel: tpu_custom_call.1
$region0: #{tpu_custom_call.1}
  #allocation0 [shape = 'u32[]', space=smem, size = 0x4, offset = 0x4, fixed_abs, tag = 'smem constant byte address 0x4 - core index']
  #allocation1 [shape = 'u32[144,128]{1,0:T(1,128)}', space=vmem, size = 0x12000, scoped, tag = 'internal scratch']
  %s0 = inlined_call_operand.vmem [shape: f32[128,32], index: 0, kind: input, shape index: {}]
  %s1 = inlined_call_operand.vmem [shape: f32[16,128], index: 1, kind: input, shape index: {}]
  %s2 = inlined_call_operand.hbm [shape: f32[1], index: 2, kind: output, shape index: {}]
  %s3 = sld [smem:[#allocation0]]
  $region18: #{tpu_custom_call.1} parent=0
    _
  %s5 = ssub.s32 1, %s3
  %s6 = scalar_select 0, %s5, %s3
  $region1: #{tpu_custom_call.1} parent=0
    #allocation2 [shape = 'u8[512]{0}', space=smem, size = 0x200, scoped, tag = 'output window, operand 0, single buffered']
    #allocation3 [shape = 's32[1]{0}', space=sflag, size = 0x4, scoped, tag = 'scoped memory for tpu_custom_call.1']
    %7 = vsyncpa [#allocation3], 0
    // Predicated region
    $region2: #{tpu_custom_call.1} parent=1 // pred_check
      _
    $region3: #{tpu_custom_call.1} parent=1 // pred_check_branch
      %9 = sbr.rel (0) target = $region5
    $region4: #{tpu_custom_call.1} parent=1 // pred_region
      _
    $region5: #{tpu_custom_call.1} parent=1 // pred_fallthru
      _
    // Predicated region
    $region6: #{tpu_custom_call.1} parent=1 // pred_check
      _
    $region7: #{tpu_custom_call.1} parent=1 // pred_check_branch
      %11 = sbr.rel (0) target = $region9
    $region8: #{tpu_custom_call.1} parent=1 // pred_region
      _
    $region9: #{tpu_custom_call.1} parent=1 // pred_fallthru
      _
    %v12 = vld [vmem:[%s0] sm:$0xff]
    %v13 = vld [vmem:[%s0 + $0x8] sm:$0xff]
    %v14 = vld [vmem:[%s0 + $0x10] sm:$0xff]
    %v15 = vld [vmem:[%s0 + $0x18] sm:$0xff]
    %v16 = vld [vmem:[%s0 + $0x20] sm:$0xff]
    %v17 = vld [vmem:[%s0 + $0x28] sm:$0xff]
    %v18 = vld [vmem:[%s0 + $0x30] sm:$0xff]
    %v19 = vld [vmem:[%s0 + $0x38] sm:$0xff]
    %v20 = vld [vmem:[%s0 + $0x40] sm:$0xff]
    %v21 = vld [vmem:[%s0 + $0x48] sm:$0xff]
    %v22 = vld [vmem:[%s0 + $0x50] sm:$0xff]
    %v23 = vld [vmem:[%s0 + $0x58] sm:$0xff]
    %v24 = vld [vmem:[%s0 + $0x60] sm:$0xff]
    %v25 = vld [vmem:[%s0 + $0x68] sm:$0xff]
    %v26 = vld [vmem:[%s0 + $0x70] sm:$0xff]
    %v27 = vld [vmem:[%s0 + $0x78] sm:$0xff]
    %v28 = vld [vmem:[%s1] sm:$0xff]
    %v29 = vld [vmem:[%s1 + $0x8] sm:$0xff]
    %30 = vmatprep.subr.mxu0 0.0
    %31 = vmatpush1.msra.mxu0 %v12
    %32 = vmatprep.subr.mxu0 0.0
    %33 = vmatpush1.msra.mxu0 %v13
    %34 = vmatprep.subr.mxu0 0.0
    %35 = vmatpush1.msra.mxu0 %v14
    %36 = vmatprep.subr.mxu0 0.0
    %37 = vmatpush1.msra.mxu0 %v15
    %38 = vmatprep.subr.mxu0 0.0
    %39 = vmatpush1.msra.mxu0 %v16
    %40 = vmatprep.subr.mxu0 0.0
    %41 = vmatpush1.msra.mxu0 %v17
    %42 = vmatprep.subr.mxu0 0.0
    %43 = vmatpush1.msra.mxu0 %v18
    %44 = vmatprep.subr.mxu0 0.0
    %45 = vmatpush1.msra.mxu0 %v19
    %46 = vmatprep.subr.mxu0 0.0
    %47 = vmatpush1.msra.mxu0 %v20
    %48 = vmatprep.subr.mxu0 0.0
    %49 = vmatpush1.msra.mxu0 %v21
    %50 = vmatprep.subr.mxu0 0.0
    %51 = vmatpush1.msra.mxu0 %v22
    %52 = vmatprep.subr.mxu0 0.0
    %53 = vmatpush1.msra.mxu0 %v23
    %54 = vmatprep.subr.mxu0 0.0
    %55 = vmatpush1.msra.mxu0 %v24
    %56 = vmatprep.subr.mxu0 0.0
    %57 = vmatpush1.msra.mxu0 %v25
    %58 = vmatprep.subr.mxu0 0.0
    %59 = vmatpush1.msra.mxu0 %v26
    %60 = vmatprep.subr.mxu0 0.0
    %61 = vmatpush1.msra.mxu0 %v27
    %62 = vmatprep.subr.mxu0 0.0
    %63 = vmatpush1.msra.mxu0 0.0
    %64 = vmatprep.subr.mxu0 0.0
    %65 = vmatpush1.msra.mxu0 0.0
    %66 = vmatprep.subr.mxu0 0.0
    %67 = vmatpush1.msra.mxu0 0.0
    %68 = vmatprep.subr.mxu0 0.0
    %69 = vmatpush1.msra.mxu0 0.0
    %70 = vmatprep.subr.mxu0 0.0
    %71 = vmatpush1.msra.mxu0 0.0
    %72 = vmatprep.subr.mxu0 0.0
    %73 = vmatpush1.msra.mxu0 0.0
    %74 = vmatprep.subr.mxu0 0.0
    %75 = vmatpush1.msra.mxu0 0.0
    %76 = vmatprep.subr.mxu0 0.0
    %77 = vmatpush1.msra.mxu0 0.0
    %78 = vmatprep.subr.mxu0 0.0
    %79 = vmatpush1.msra.mxu0 0.0
    %80 = vmatprep.subr.mxu0 0.0
    %81 = vmatpush1.msra.mxu0 0.0
    %82 = vmatprep.subr.mxu0 0.0
    %83 = vmatpush1.msra.mxu0 0.0
    %84 = vmatprep.subr.mxu0 0.0
    %85 = vmatpush1.msra.mxu0 0.0
    %86 = vmatprep.subr.mxu0 0.0
    %87 = vmatpush1.msra.mxu0 0.0
    %88 = vmatprep.subr.mxu0 0.0
    %89 = vmatpush1.msra.mxu0 0.0
    %90 = vmatprep.subr.mxu0 0.0
    %91 = vmatpush1.msra.mxu0 0.0
    %92 = vmatprep.subr.mxu0 0.0
    %93 = vmatpush1.msra.mxu0 0.0
    %94 = vmatprep.mubr.f32.mxu0 0.0
    %95 = vmatmul.mubr.f32.gmra.mrb[0].mxu0 %v28
    %v96 = vpop.f32.mrb[0].mxu0
    %v97 = vadd.f32 0.0, %v96
    %v98 = vpop.f32.mrb[0].mxu0
    %99 = vmatprep.mubr.f32.mxu0 0.0
    %100 = vmatmul.mubr.f32.gmra.mrb[0].mxu0 %v29
    %v101 = vpop.f32.mrb[0].mxu0
    %v102 = vadd.f32 0.0, %v101
    %v103 = vpop.f32.mrb[0].mxu0
    %104 = vdwg.mxu0
    %v105 = vmul.f32 %v97, 0.125
    %v106 = vmul.f32 %v102, 0.125
    %vm107 = vcmask 261120
    %v109 = vsel %vm107, %v105, 0
    %v112 = vsel %vm107, %v106, 0
    %v115 = vsel %vm107, %v12, 0
    %v118 = vsel %vm107, %v13, 0
    %v121 = vsel %vm107, %v14, 0
    %v124 = vsel %vm107, %v15, 0
    %v127 = vsel %vm107, %v16, 0
    %v130 = vsel %vm107, %v17, 0
    %v133 = vsel %vm107, %v18, 0
    %v136 = vsel %vm107, %v19, 0
    %v139 = vsel %vm107, %v20, 0
    %v142 = vsel %vm107, %v21, 0
    %v145 = vsel %vm107, %v22, 0
    %v148 = vsel %vm107, %v23, 0
    %v151 = vsel %vm107, %v24, 0
    %v154 = vsel %vm107, %v25, 0
    %v157 = vsel %vm107, %v26, 0
    %v160 = vsel %vm107, %v27, 0
    %162 = vmatprep.subr.mxu0 0.0
    %163 = vmatpush1.xpose.msra.mxu0 %v115
    %164 = vmatprep.subr.mxu0 0.0
    %165 = vmatpush1.xpose.msra.mxu0 %v118
    %166 = vmatprep.subr.mxu0 0.0
    %167 = vmatpush1.xpose.msra.mxu0 %v121
    %168 = vmatprep.subr.mxu0 0.0
    %169 = vmatpush1.xpose.msra.mxu0 %v124
    %170 = vmatprep.subr.mxu0 0.0
    %171 = vmatpush1.xpose.msra.mxu0 %v127
    %172 = vmatprep.subr.mxu0 0.0
    %173 = vmatpush1.xpose.msra.mxu0 %v130
    %174 = vmatprep.subr.mxu0 0.0
    %175 = vmatpush1.xpose.msra.mxu0 %v133
    %176 = vmatprep.subr.mxu0 0.0
    %177 = vmatpush1.xpose.msra.mxu0 %v136
    %178 = vmatprep.subr.mxu0 0.0
    %179 = vmatpush1.xpose.msra.mxu0 %v139
    %180 = vmatprep.subr.mxu0 0.0
    %181 = vmatpush1.xpose.msra.mxu0 %v142
    %182 = vmatprep.subr.mxu0 0.0
    %183 = vmatpush1.xpose.msra.mxu0 %v145
    %184 = vmatprep.subr.mxu0 0.0
    %185 = vmatpush1.xpose.msra.mxu0 %v148
    %186 = vmatprep.subr.mxu0 0.0
    %187 = vmatpush1.xpose.msra.mxu0 %v151
    %188 = vmatprep.subr.mxu0 0.0
    %189 = vmatpush1.xpose.msra.mxu0 %v154
    %190 = vmatprep.subr.mxu0 0.0
    %191 = vmatpush1.xpose.msra.mxu0 %v157
    %192 = vmatprep.subr.mxu0 0.0
    %193 = vmatpush1.xpose.msra.mxu0 %v160
    %194 = vmatprep.subr.mxu0 0.0
    %195 = vmatpush1.xpose.msra.mxu0 0.0
    %196 = vmatprep.subr.mxu0 0.0
    %197 = vmatpush1.xpose.msra.mxu0 0.0
    %198 = vmatprep.subr.mxu0 0.0
    %199 = vmatpush1.xpose.msra.mxu0 0.0
    %200 = vmatprep.subr.mxu0 0.0
    %201 = vmatpush1.xpose.msra.mxu0 0.0
    %202 = vmatprep.subr.mxu0 0.0
    %203 = vmatpush1.xpose.msra.mxu0 0.0
    %204 = vmatprep.subr.mxu0 0.0
    %205 = vmatpush1.xpose.msra.mxu0 0.0
    %206 = vmatprep.subr.mxu0 0.0
    %207 = vmatpush1.xpose.msra.mxu0 0.0
    %208 = vmatprep.subr.mxu0 0.0
    %209 = vmatpush1.xpose.msra.mxu0 0.0
    %210 = vmatprep.subr.mxu0 0.0
    %211 = vmatpush1.xpose.msra.mxu0 0.0
    %212 = vmatprep.subr.mxu0 0.0
    %213 = vmatpush1.xpose.msra.mxu0 0.0
    %214 = vmatprep.subr.mxu0 0.0
    %215 = vmatpush1.xpose.msra.mxu0 0.0
    %216 = vmatprep.subr.mxu0 0.0
    %217 = vmatpush1.xpose.msra.mxu0 0.0
    %218 = vmatprep.subr.mxu0 0.0
    %219 = vmatpush1.xpose.msra.mxu0 0.0
    %220 = vmatprep.subr.mxu0 0.0
    %221 = vmatpush1.xpose.msra.mxu0 0.0
    %222 = vmatprep.subr.mxu0 0.0
    %223 = vmatpush1.xpose.msra.mxu0 0.0
    %224 = vmatprep.subr.mxu0 0.0
    %225 = vmatpush1.xpose.msra.mxu0 0.0
    %226 = vmatprep.mubr.f32.mxu0 0.0
    %227 = vmatmul.mubr.f32.gmra.mrb[0].mxu0 %v109
    %v228 = vpop.f32.mrb[0].mxu0
    %v229 = vadd.f32 0.0, %v228
    %v230 = vpop.f32.mrb[0].mxu0
    %231 = vmatprep.mubr.f32.mxu0 0.0
    %232 = vmatmul.mubr.f32.gmra.mrb[0].mxu0 %v112
    %v233 = vpop.f32.mrb[0].mxu0
    %v234 = vadd.f32 0.0, %v233
    %v235 = vpop.f32.mrb[0].mxu0
    %236 = vdwg.mxu0
    %v237 = vmul.f32 %v12, %v12
    %v238 = vmul.f32 %v13, %v13
    %v239 = vmul.f32 %v14, %v14
    %v240 = vmul.f32 %v15, %v15
    %v241 = vmul.f32 %v16, %v16
    %v242 = vmul.f32 %v17, %v17
    %v243 = vmul.f32 %v18, %v18
    %v244 = vmul.f32 %v19, %v19
    %v245 = vmul.f32 %v20, %v20
    %v246 = vmul.f32 %v21, %v21
    %v247 = vmul.f32 %v22, %v22
    %v248 = vmul.f32 %v23, %v23
    %v249 = vmul.f32 %v24, %v24
    %v250 = vmul.f32 %v25, %v25
    %v251 = vmul.f32 %v26, %v26
    %v252 = vmul.f32 %v27, %v27
    %v253 = vsel %vm107, %v237, 0.0
    %254 = vadd.xlane.f32.xlu0 %v253
    %v255 = vpop.xlane.xlu0 %254
    %v256 = vsel %vm107, %v238, 0.0
    %257 = vadd.xlane.f32.xlu0 %v256
    %v258 = vpop.xlane.xlu0 %257
    %v259 = vsel %vm107, %v239, 0.0
    %260 = vadd.xlane.f32.xlu0 %v259
    %v261 = vpop.xlane.xlu0 %260
    %v262 = vsel %vm107, %v240, 0.0
    %263 = vadd.xlane.f32.xlu0 %v262
    %v264 = vpop.xlane.xlu0 %263
    %v265 = vsel %vm107, %v241, 0.0
    %266 = vadd.xlane.f32.xlu0 %v265
    %v267 = vpop.xlane.xlu0 %266
    %v268 = vsel %vm107, %v242, 0.0
    %269 = vadd.xlane.f32.xlu0 %v268
    %v270 = vpop.xlane.xlu0 %269
    %v271 = vsel %vm107, %v243, 0.0
    %272 = vadd.xlane.f32.xlu0 %v271
    %v273 = vpop.xlane.xlu0 %272
    %v274 = vsel %vm107, %v244, 0.0
    %275 = vadd.xlane.f32.xlu0 %v274
    %v276 = vpop.xlane.xlu0 %275
    %v277 = vsel %vm107, %v245, 0.0
    %278 = vadd.xlane.f32.xlu0 %v277
    %v279 = vpop.xlane.xlu0 %278
    %v280 = vsel %vm107, %v246, 0.0
    %281 = vadd.xlane.f32.xlu0 %v280
    %v282 = vpop.xlane.xlu0 %281
    %v283 = vsel %vm107, %v247, 0.0
    %284 = vadd.xlane.f32.xlu0 %v283
    %v285 = vpop.xlane.xlu0 %284
    %v286 = vsel %vm107, %v248, 0.0
    %287 = vadd.xlane.f32.xlu0 %v286
    %v288 = vpop.xlane.xlu0 %287
    %v289 = vsel %vm107, %v249, 0.0
    %290 = vadd.xlane.f32.xlu0 %v289
    %v291 = vpop.xlane.xlu0 %290
    %v292 = vsel %vm107, %v250, 0.0
    %293 = vadd.xlane.f32.xlu0 %v292
    %v294 = vpop.xlane.xlu0 %293
    %v295 = vsel %vm107, %v251, 0.0
    %296 = vadd.xlane.f32.xlu0 %v295
    %v297 = vpop.xlane.xlu0 %296
    %v298 = vsel %vm107, %v252, 0.0
    %299 = vadd.xlane.f32.xlu0 %v298
    %v300 = vpop.xlane.xlu0 %299
    %v301 = vmul.f32 %v105, %v105
    %v302 = vmul.f32 %v106, %v106
    %v303 = vsel %vm107, %v301, 0.0
    %304 = vadd.xlane.f32.xlu0 %v303
    %v305 = vpop.xlane.xlu0 %304
    %v306 = vsel %vm107, %v302, 0.0
    %307 = vadd.xlane.f32.xlu0 %v306
    %v308 = vpop.xlane.xlu0 %307
    %v325 = vlaneseq
    %v326 = vand.u32 %v325, 127
    %v327 = vlaneseq
    %v328 = vshrl.u32 %v327, 7
    %v329 = vsub.s32 %v326, %v328
    %v330 = vrot.slane %v255, %v329
    %v331 = vadd.s32 %v326, 4294967288
    %v332 = vlaneseq
    %v333 = vshrl.u32 %v332, 7
    %v334 = vsub.s32 %v331, %v333
    %v335 = vrot.slane %v258, %v334
    %vm336 = vcmask 130112
    %v337 = vsel %vm336, %v335, %v330
    %v338 = vadd.s32 %v326, 4294967280
    %v339 = vlaneseq
    %v340 = vshrl.u32 %v339, 7
    %v341 = vsub.s32 %v338, %v340
    %v342 = vrot.slane %v261, %v341
    %vm343 = vcmask 195712
    %v344 = vsel %vm343, %v342, %v337
    %v345 = vadd.s32 %v326, 4294967272
    %v346 = vlaneseq
    %v347 = vshrl.u32 %v346, 7
    %v348 = vsub.s32 %v345, %v347
    %v349 = vrot.slane %v264, %v348
    %vm350 = vcmask 261312
    %v351 = vsel %vm350, %v349, %v344
    %v352 = vadd.s32 %v326, 4294967264
    %v353 = vlaneseq
    %v354 = vshrl.u32 %v353, 7
    %v355 = vsub.s32 %v352, %v354
    %v356 = vrot.slane %v267, %v355
    %vm357 = vcmask 326912
    %v358 = vsel %vm357, %v356, %v351
    %v359 = vadd.s32 %v326, 4294967256
    %v360 = vlaneseq
    %v361 = vshrl.u32 %v360, 7
    %v362 = vsub.s32 %v359, %v361
    %v363 = vrot.slane %v270, %v362
    %vm364 = vcmask 392512
    %v365 = vsel %vm364, %v363, %v358
    %v366 = vadd.s32 %v326, 4294967248
    %v367 = vlaneseq
    %v368 = vshrl.u32 %v367, 7
    %v369 = vsub.s32 %v366, %v368
    %v370 = vrot.slane %v273, %v369
    %vm371 = vcmask 458112
    %v372 = vsel %vm371, %v370, %v365
    %v373 = vadd.s32 %v326, 4294967240
    %v374 = vlaneseq
    %v375 = vshrl.u32 %v374, 7
    %v376 = vsub.s32 %v373, %v375
    %v377 = vrot.slane %v276, %v376
    %vm378 = vcmask 523712
    %v379 = vsel %vm378, %v377, %v372
    %v380 = vadd.s32 %v326, 4294967232
    %v381 = vlaneseq
    %v382 = vshrl.u32 %v381, 7
    %v383 = vsub.s32 %v380, %v382
    %v384 = vrot.slane %v279, %v383
    %vm385 = vcmask 589312
    %v386 = vsel %vm385, %v384, %v379
    %v387 = vadd.s32 %v326, 4294967224
    %v388 = vlaneseq
    %v389 = vshrl.u32 %v388, 7
    %v390 = vsub.s32 %v387, %v389
    %v391 = vrot.slane %v282, %v390
    %vm392 = vcmask 654912
    %v393 = vsel %vm392, %v391, %v386
    %v394 = vadd.s32 %v326, 4294967216
    %v395 = vlaneseq
    %v396 = vshrl.u32 %v395, 7
    %v397 = vsub.s32 %v394, %v396
    %v398 = vrot.slane %v285, %v397
    %vm399 = vcmask 720512
    %v400 = vsel %vm399, %v398, %v393
    %v401 = vadd.s32 %v326, 4294967208
    %v402 = vlaneseq
    %v403 = vshrl.u32 %v402, 7
    %v404 = vsub.s32 %v401, %v403
    %v405 = vrot.slane %v288, %v404
    %vm406 = vcmask 786112
    %v407 = vsel %vm406, %v405, %v400
    %v408 = vadd.s32 %v326, 4294967200
    %v409 = vlaneseq
    %v410 = vshrl.u32 %v409, 7
    %v411 = vsub.s32 %v408, %v410
    %v412 = vrot.slane %v291, %v411
    %vm413 = vcmask 851712
    %v414 = vsel %vm413, %v412, %v407
    %v415 = vadd.s32 %v326, 4294967192
    %v416 = vlaneseq
    %v417 = vshrl.u32 %v416, 7
    %v418 = vsub.s32 %v415, %v417
    %v419 = vrot.slane %v294, %v418
    %vm420 = vcmask 917312
    %v421 = vsel %vm420, %v419, %v414
    %v422 = vadd.s32 %v326, 4294967184
    %v423 = vlaneseq
    %v424 = vshrl.u32 %v423, 7
    %v425 = vsub.s32 %v422, %v424
    %v426 = vrot.slane %v297, %v425
    %vm427 = vcmask 982912
    %v428 = vsel %vm427, %v426, %v421
    %v429 = vadd.s32 %v326, 4294967176
    %v430 = vlaneseq
    %v431 = vshrl.u32 %v430, 7
    %v432 = vsub.s32 %v429, %v431
    %v433 = vrot.slane %v300, %v432
    %vm434 = vcmask 1048512
    %v435 = vsel %vm434, %v433, %v428
    %vm436 = vcmask 1042434
    %v437 = vsel %vm436, %v435, %v435
    %vm438 = vcmask 1043459
    %v439 = vsel %vm438, %v435, %v437
    %vm440 = vcmask 1044484
    %v441 = vsel %vm440, %v435, %v439
    %vm442 = vcmask 1045509
    %v443 = vsel %vm442, %v435, %v441
    %vm444 = vcmask 1046534
    %v445 = vsel %vm444, %v435, %v443
    %vm446 = vcmask 1047559
    %v447 = vsel %vm446, %v435, %v445
    %v449 = vmul.f32 %v305, %v447
    %v450 = vmul.f32 %v308, %v447
    %v451 = vmax.f32 %v449, 1e-12
    %v452 = vmax.f32 %v450, 1e-12
    %v453 = vrsqrt.pop %v451
    %v454 = vrsqrt.pop %v452
    %v455 = vmul.f32 %v229, %v453
    %v456 = vmul.f32 %v234, %v454
    %v457 = vmul.f32 %v455, %v28
    %v458 = vmul.f32 %v456, %v29
    %v459 = vadd.f32 %v457, %v458
    %v460 = vrot.slane %v459, 4
    %v461 = vadd.f32 %v459, %v460
    %v462 = vrot.slane %v461, 2
    %v463 = vadd.f32 %v461, %v462
    %v464 = vrot.slane %v463, 1
    %v465 = vadd.f32 %v463, %v464
    %v466 = vmul.f32 %v28, 4.0
    %v467 = vmul.f32 %v29, 4.0
    %v468 = vsub.f32 %v455, %v466
    %v469 = vsub.f32 %v456, %v467
    %v470 = vmax.f32 %v468, %v469
    %v471 = vrot.slane %v470, 4
    %v472 = vmax.f32 %v470, %v471
    %v473 = vrot.slane %v472, 2
    %v474 = vmax.f32 %v472, %v473
    %v475 = vrot.slane %v474, 1
    %v476 = vmax.f32 %v474, %v475
    %v477 = vsub.f32 0.0, %v465
    %v478 = vxor.u32 %v477, 2147483648
    %v479 = vmul.f32 %v478, 1.442695
    %v480 = vpow.pop %v479
    %v481 = vadd.f32 %v480, 1.0
    %v482 = vrcp.pop %v481
    %v483 = vmul.f32 1.0, %v482
    %v484 = vxor.u32 %v476, 2147483648
    %v485 = vmul.f32 %v484, 1.442695
    %v486 = vpow.pop %v485
    %v487 = vadd.f32 %v486, 1.0
    %v488 = vrcp.pop %v487
    %v489 = vmul.f32 1.0, %v488
    %v490 = vadd.f32 %v483, %v489
    %491 = vadd.xlane.f32.xlu0 %v490
    %v492 = vpop.xlane.xlu0 %491
    %s493 = vtos %v492
    %s494 = smul.f32 %s493, 0.0078125
    %s495 = scalar_lea.smem [#allocation2], 0
    %496 = sst [smem:[%s495]] %s494
    // Predicated region
    $region10: #{tpu_custom_call.1} parent=1 // pred_check
      _
    $region11: #{tpu_custom_call.1} parent=1 // pred_check_branch
      %498 = sbr.rel (0) target = $region13
    $region12: #{tpu_custom_call.1} parent=1 // pred_region
      %s500 = ssub.s32 16, 16
      %501 = vsyncadd [#allocation3], %s500
      %504 = dma.smem_to_hbm [#allocation2], 16, %s2, [#allocation3]
    $region13: #{tpu_custom_call.1} parent=1 // pred_fallthru
      _
    // Predicated region
    $region14: #{tpu_custom_call.1} parent=1 // pred_check
      _
    $region15: #{tpu_custom_call.1} parent=1 // pred_check_branch
      %506 = sbr.rel (0) target = $region17
    $region16: #{tpu_custom_call.1} parent=1 // pred_region
      %507 = dma.done [#allocation3], 16
    $region17: #{tpu_custom_call.1} parent=1 // pred_fallthru
      _
    %508 = sfence
    %509 = vsyncpa [#allocation3], 1

</llo_original>
